<compile_context>
chip_gen: v5e
topology: v5e:2x2
jax: 0.10.0
libtpu: 0.0.40
codegen_flags: <defaults>
</compile_context>

<pallas_src>
import functools

import jax
import jax.numpy as jnp
from jax.experimental import pallas as pl
from jax.experimental.pallas import tpu as pltpu


def _ce_body(x_ref, t_ref, m_ref, num_ref, den_ref, *, hw, tile_p, splits,
             tiles_per_split, needs_edge):
    """Shared kernel body.

    x_ref:   (C, tile_p)   logits (native dtype, cast to f32 in-register)
    t_ref:   (1, tile_p)   int32 target class ids
    m_ref:   (1, tile_p)   loss mask in native dtype, or None (unmasked path)
    num_ref: (1, tile_p)   lane-parallel accumulator of loss (* mask)
    den_ref: (1, tile_p)   lane-parallel accumulator of mask, or None
    """
    g = pl.program_id(0)   # parallel axis: image (times optional pixel split)
    i = pl.program_id(1)   # reduction axis: pixel tile within this chunk

    @pl.when(i == 0)
    def _():
        num_ref[...] = jnp.zeros_like(num_ref)
        if den_ref is not None:
            den_ref[...] = jnp.zeros_like(den_ref)

    x = x_ref[...].astype(jnp.float32)             # (C, TP)
    t = t_ref[...]                                 # (1, TP) int32

    # numerically stable CE; `picked` uses raw x so (x - xmax) only feeds exp
    xmax = jnp.max(x, axis=0, keepdims=True)                           # (1, TP)
    cls = jax.lax.broadcasted_iota(jnp.int32, x.shape, 0)              # (C, TP)
    picked = jnp.sum(jnp.where(cls == t, x, 0.0), axis=0, keepdims=True)
    lse = jnp.log(jnp.sum(jnp.exp(x - xmax), axis=0, keepdims=True))   # (1, TP)
    loss = (xmax - picked) + lse                                       # per-pixel CE

    if m_ref is not None:
        w = m_ref[...].astype(jnp.float32)         # (1, TP)
        contrib = loss * w
    else:
        w = None
        contrib = loss

    if not needs_edge:
        # fast path: every tile is fully inside the real pixel range
        num_ref[...] += contrib
        if den_ref is not None:
            den_ref[...] += w
        return

    if splits == 1:
        tile_global = i
    else:
        tile_global = (g % splits) * tiles_per_split + i
    is_edge = (tile_global + 1) * tile_p > hw      # scalar: tile touches / passes end

    @pl.when(jnp.logical_not(is_edge))
    def _():
        num_ref[...] += contrib
        if den_ref is not None:
            den_ref[...] += w

    @pl.when(is_edge)
    def _():
        # select (never multiply) so garbage lanes (possible NaN/Inf) cannot propagate
        lane = jax.lax.broadcasted_iota(jnp.int32, (1, tile_p), 1)
        valid = (lane + tile_global * tile_p) < hw
        num_ref[...] += jnp.where(valid, contrib, 0.0)
        if den_ref is not None:
            den_ref[...] += jnp.where(valid, w, 0.0)


def _ce_masked_kernel(x_ref, t_ref, m_ref, num_ref, den_ref, **kw):
    _ce_body(x_ref, t_ref, m_ref, num_ref, den_ref, **kw)


def _ce_unmasked_kernel(x_ref, t_ref, num_ref, **kw):
    _ce_body(x_ref, t_ref, None, num_ref, None, **kw)


def cross_entropy_masked_loss(logits, target, loss_mask=None, *, tile_p=8192):
    """Matches CrossEntropyMaskedLoss.forward (default nn.CrossEntropyLoss kwargs).

    logits: (N, C, H, W) float (bf16/f32 -- consumed in native dtype);
    target: (N, H, W) or (N, 1, H, W) integer (int32 preferred, no extra pass);
    loss_mask: optional (N, H, W) or (N, 1, H, W) float/bool (consumed in native dtype).
    Returns a scalar float32.
    """
    N, C, H, W = logits.shape
    if target.ndim == 4 and target.shape[1] == 1:
        target = target[:, 0]
    if target.dtype != jnp.int32:
        target = target.astype(jnp.int32)

    has_mask = loss_mask is not None
    if has_mask:
        if loss_mask.ndim > 3:
            loss_mask = loss_mask[:, 0]
        if loss_mask.dtype == jnp.bool_:
            loss_mask = loss_mask.astype(jnp.uint8)   # 1B/pixel; kernel casts to f32

    HW = H * W
    # free reshapes (no transpose, no data movement): pixels -> lane axis
    x3 = logits.reshape(N, C, HW)
    t3 = target.reshape(N, 1, HW)

    # ---- generation-/C-aware lane tile size -------------------------------------
    try:
        info = pltpu.get_tpu_info()
        vmem_bytes = int(getattr(info, "vmem_capacity_bytes", 64 * 2**20))
    except Exception:  # conservative default (v7x has 64 MiB per TC)
        vmem_bytes = 64 * 2**20
    budget = int(vmem_bytes * 0.4)   # working-set budget, leave pipelining headroom

    x_item = jnp.dtype(logits.dtype).itemsize
    m_item = jnp.dtype(loss_mask.dtype).itemsize if has_mask else 0
    # per-lane bytes: 2x double-buffered logits blocks + ~5 live f32 (C,) temporaries
    # + double-buffered int32 target (+ mask) blocks + two f32 resident accumulators
    bytes_per_lane = 2 * C * x_item + 5 * C * 4 + 2 * 4 + 2 * m_item + 2 * 4

    if HW <= 128:
        tp = HW                                   # full-extent lane block (allowed)
    else:
        tp_budget = max(128, (budget // max(bytes_per_lane, 1)) // 128 * 128)
        tp_req = max(128, ((tile_p + 127) // 128) * 128)
        tp_full = (HW // 128) * 128               # largest 128-multiple <= HW
        tp = max(128, min(tp_req, tp_budget, tp_full))

    num_tiles = pl.cdiv(HW, tp)

    # v7x has 2 TensorCores: keep the parallel axis extent >= 2 when N == 1
    splits = 2 if (N == 1 and num_tiles >= 2) else 1
    tiles_per_split = pl.cdiv(num_tiles, splits)
    grid = (N * splits, tiles_per_split)

    needs_edge = (HW % tp != 0) or (splits * tiles_per_split != num_tiles)
    last_block = num_tiles - 1

    if splits == 1:
        def in_map(n, i):
            return (n, 0, i)

        def out_map(n, i):
            return (n, 0, 0)
    else:
        def in_map(g, i):
            blk = jnp.minimum((g % splits) * tiles_per_split + i, last_block)
            return (g // splits, 0, blk)

        def out_map(g, i):
            return (g, 0, 0)

    in_specs = [
        pl.BlockSpec((None, C, tp), in_map),      # logits (native dtype)
        pl.BlockSpec((None, 1, tp), in_map),      # target (int32)
    ]
    args = [x3, t3]
    kern_kwargs = dict(hw=HW, tile_p=tp, splits=splits,
                       tiles_per_split=tiles_per_split, needs_edge=needs_edge)
    if has_mask:
        m3 = loss_mask.reshape(N, 1, HW)          # native dtype, no wrapper upcast
        in_specs.append(pl.BlockSpec((None, 1, tp), in_map))
        args.append(m3)
        kernel = functools.partial(_ce_masked_kernel, **kern_kwargs)
        out_specs = [pl.BlockSpec((None, 1, tp), out_map),
                     pl.BlockSpec((None, 1, tp), out_map)]
        out_shape = (jax.ShapeDtypeStruct((N * splits, 1, tp), jnp.float32),
                     jax.ShapeDtypeStruct((N * splits, 1, tp), jnp.float32))
    else:
        kernel = functools.partial(_ce_unmasked_kernel, **kern_kwargs)
        out_specs = pl.BlockSpec((None, 1, tp), out_map)
        out_shape = jax.ShapeDtypeStruct((N * splits, 1, tp), jnp.float32)

    # advisory scheduling hint for XLA around the custom call
    bytes_accessed = (x3.size * x_item + t3.size * 4
                      + (loss_mask.size * m_item if has_mask else 0)
                      + (N * splits) * tp * 4 * (2 if has_mask else 1))
    cost = pl.CostEstimate(flops=int((6 * C + 10) * N * HW),
                           transcendentals=int((C + 1) * N * HW),
                           bytes_accessed=int(bytes_accessed))

    est_working = bytes_per_lane * tp + (1 << 20)
    vmem_limit = int(min(vmem_bytes * 0.9, max(32 * 2**20, 2 * est_working)))

    outs = pl.pallas_call(
        kernel,
        out_shape=out_shape,
        grid_spec=pltpu.PrefetchScalarGridSpec(
            num_scalar_prefetch=0,
            grid=grid,
            in_specs=in_specs,
            out_specs=out_specs),
        compiler_params=pltpu.CompilerParams(
            dimension_semantics=("parallel", "arbitrary"),
            vmem_limit_bytes=vmem_limit),
        cost_estimate=cost,
    )(*args)

    if has_mask:
        num_out, den_out = outs
        # torch: (loss * mask).sum() / mask.sum().clamp(min=1e-8)
        return jnp.sum(num_out) / jnp.maximum(jnp.sum(den_out), jnp.float32(1e-8))
    # torch: loss.mean()  (divide by total element count)
    return jnp.sum(outs) / jnp.float32(N * HW)


def _reference(logits, target, loss_mask):
    if target.ndim == 4 and target.shape[1] == 1:
        target = target[:, 0]
    logp = jax.nn.log_softmax(logits.astype(jnp.float32), axis=1)
    loss = -jnp.take_along_axis(logp, target[:, None].astype(jnp.int32), axis=1)[:, 0]
    if loss_mask is None:
        return loss.mean()
    if loss_mask.ndim > loss.ndim:
        loss_mask = loss_mask[:, 0]
    loss_mask = loss_mask.astype(jnp.float32)
    return (loss * loss_mask).sum() / jnp.maximum(loss_mask.sum(), 1e-8)


if __name__ == "__main__":
    key = jax.random.PRNGKey(0)

    # Case A: baseline small shapes, f32 mask + unmasked path
    k1, k2, k3, k4, k5, k6, k7, k8, k9 = jax.random.split(key, 9)
    N, C, H, W = 2, 4, 16, 16
    x = jax.random.normal(k1, (N, C, H, W), dtype=jnp.float32)
    tgt = jax.random.randint(k2, (N, 1, H, W), 0, C)
    msk = (jax.random.uniform(k3, (N, 1, H, W)) > 0.5).astype(jnp.float32)

    out_m = cross_entropy_masked_loss(x, tgt, msk)
    out_u = cross_entropy_masked_loss(x, tgt, None)
    jax.block_until_ready((out_m, out_u))
    assert jnp.allclose(out_m, _reference(x, tgt, msk), rtol=1e-5, atol=1e-5)
    assert jnp.allclose(out_u, _reference(x, tgt, None), rtol=1e-5, atol=1e-5)

    # Case B: N=1, ragged spatial extent (partial edge tile), bool mask (-> uint8 path)
    N2, C2, H2, W2 = 1, 3, 7, 19
    x2 = jax.random.normal(k4, (N2, C2, H2, W2), dtype=jnp.float32)
    tgt2 = jax.random.randint(k5, (N2, H2, W2), 0, C2)
    msk2 = jax.random.uniform(k6, (N2, H2, W2)) > 0.3
    out2 = cross_entropy_masked_loss(x2, tgt2, msk2)
    jax.block_until_ready(out2)
    assert jnp.allclose(out2, _reference(x2, tgt2, msk2), rtol=1e-5, atol=1e-5)

    # Case C: N=1 with multiple pixel tiles (exercises the 2-way parallel split), uint8 mask
    N3, C3, H3, W3 = 1, 4, 16, 48
    x3_ = jax.random.normal(k7, (N3, C3, H3, W3), dtype=jnp.float32)
    tgt3 = jax.random.randint(k8, (N3, 1, H3, W3), 0, C3)
    msk3 = (jax.random.uniform(k9, (N3, 1, H3, W3)) > 0.5).astype(jnp.uint8)
    out3_m = cross_entropy_masked_loss(x3_, tgt3, msk3, tile_p=256)
    out3_u = cross_entropy_masked_loss(x3_, tgt3, None, tile_p=256)
    jax.block_until_ready((out3_m, out3_u))
    assert jnp.allclose(out3_m, _reference(x3_, tgt3, msk3), rtol=1e-5, atol=1e-5)
    assert jnp.allclose(out3_u, _reference(x3_, tgt3, None), rtol=1e-5, atol=1e-5)

    print("KERNEL_OK")
</pallas_src>

<mosaic_0001>
module attributes {stable_mosaic.version = 11 : i64} {
  func.func @_ce_masked_kernel(%arg0: i32, %arg1: i32, %arg2: memref<1x4x256xf32, #tpu.memory_space<vmem>>, %arg3: memref<1x1x256xi32, #tpu.memory_space<vmem>>, %arg4: memref<1x1x256xf32, #tpu.memory_space<vmem>>, %arg5: memref<1x1x256xf32, #tpu.memory_space<vmem>>, %arg6: memref<1x1x256xf32, #tpu.memory_space<vmem>>) attributes {dimension_semantics = [#tpu.dimension_semantics<parallel>, #tpu.dimension_semantics<arbitrary>], iteration_bounds = array<i64: 2, 1>, scalar_prefetch = 0 : i64, scratch_operands = 0 : i64, tpu.core_type = #tpu.core_type<tc>, window_params = [{transform_indices = @transform_0, window_bounds = array<i64: 1, 4, 256>}, {transform_indices = @transform_1, window_bounds = array<i64: 1, 1, 256>}, {transform_indices = @transform_2, window_bounds = array<i64: 1, 1, 256>}, {transform_indices = @transform_3, window_bounds = array<i64: 1, 1, 256>}, {transform_indices = @transform_4, window_bounds = array<i64: 1, 1, 256>}]} {
    %c0_i32 = arith.constant 0 : i32
    %0 = arith.cmpi eq, %arg1, %c0_i32 : i32
    %1 = arith.extui %0 : i1 to i32
    %c0_i32_0 = arith.constant 0 : i32
    %2 = arith.cmpi ne, %1, %c0_i32_0 : i32
    scf.if %2 {
      %cst_24 = arith.constant 0.000000e+00 : f32
      %39 = vector.broadcast %cst_24 : f32 to vector<1x256xf32>
      %c0_25 = arith.constant 0 : index
      %c0_26 = arith.constant 0 : index
      %c0_27 = arith.constant 0 : index
      %40 = vector.load %arg5[%c0_25, %c0_26, %c0_27] : memref<1x1x256xf32, #tpu.memory_space<vmem>>, vector<1x1x256xf32>
      %41 = vector.shape_cast %40 : vector<1x1x256xf32> to vector<1x256xf32>
      %42 = vector.shape_cast %39 : vector<1x256xf32> to vector<1x1x256xf32>
      tpu.vector_store %arg5[%c0_25, %c0_26, %c0_27], %42 {strides = array<i32>} : memref<1x1x256xf32, #tpu.memory_space<vmem>>, vector<1x1x256xf32>,
      %cst_28 = arith.constant 0.000000e+00 : f32
      %43 = vector.broadcast %cst_28 : f32 to vector<1x256xf32>
      %c0_29 = arith.constant 0 : index
      %c0_30 = arith.constant 0 : index
      %c0_31 = arith.constant 0 : index
      %44 = vector.load %arg6[%c0_29, %c0_30, %c0_31] : memref<1x1x256xf32, #tpu.memory_space<vmem>>, vector<1x1x256xf32>
      %45 = vector.shape_cast %44 : vector<1x1x256xf32> to vector<1x256xf32>
      %46 = vector.shape_cast %43 : vector<1x256xf32> to vector<1x1x256xf32>
      tpu.vector_store %arg6[%c0_29, %c0_30, %c0_31], %46 {strides = array<i32>} : memref<1x1x256xf32, #tpu.memory_space<vmem>>, vector<1x1x256xf32>,
    } else {
    }
    %c0 = arith.constant 0 : index
    %c0_1 = arith.constant 0 : index
    %c0_2 = arith.constant 0 : index
    %3 = vector.load %arg2[%c0, %c0_1, %c0_2] : memref<1x4x256xf32, #tpu.memory_space<vmem>>, vector<1x4x256xf32>
    %4 = vector.shape_cast %3 : vector<1x4x256xf32> to vector<4x256xf32>
    %c0_3 = arith.constant 0 : index
    %c0_4 = arith.constant 0 : index
    %c0_5 = arith.constant 0 : index
    %5 = vector.load %arg3[%c0_3, %c0_4, %c0_5] : memref<1x1x256xi32, #tpu.memory_space<vmem>>, vector<1x1x256xi32>
    %6 = vector.shape_cast %5 : vector<1x1x256xi32> to vector<1x256xi32>
    %cst = arith.constant dense<0xFF800000> : vector<256xf32>
    %7 = vector.multi_reduction <maximumf>, %4, %cst [0] : vector<4x256xf32> to vector<256xf32>
    %8 = vector.shape_cast %7 : vector<256xf32> to vector<1x256xf32>
    %9 = tpu.iota {dimensions = array<i32: 0>} : vector<4x256xi32>
    %10 = vector.broadcast %6 : vector<1x256xi32> to vector<4x256xi32>
    %11 = arith.cmpi eq, %9, %10 : vector<4x256xi32>
    %cst_6 = arith.constant 0.000000e+00 : f32
    %12 = vector.broadcast %cst_6 : f32 to vector<4x256xf32>
    %13 = arith.select %11, %4, %12 : vector<4x256xi1>, vector<4x256xf32>
    %cst_7 = arith.constant dense<0.000000e+00> : vector<256xf32>
    %14 = vector.multi_reduction <add>, %13, %cst_7 [0] : vector<4x256xf32> to vector<256xf32>
    %15 = vector.shape_cast %14 : vector<256xf32> to vector<1x256xf32>
    %16 = vector.broadcast %8 : vector<1x256xf32> to vector<4x256xf32>
    %17 = arith.subf %4, %16 : vector<4x256xf32>
    %18 = math.exp %17 : vector<4x256xf32>
    %cst_8 = arith.constant dense<0.000000e+00> : vector<256xf32>
    %19 = vector.multi_reduction <add>, %18, %cst_8 [0] : vector<4x256xf32> to vector<256xf32>
    %20 = vector.shape_cast %19 : vector<256xf32> to vector<1x256xf32>
    %21 = math.log %20 : vector<1x256xf32>
    %22 = arith.subf %8, %15 : vector<1x256xf32>
    %23 = arith.addf %22, %21 : vector<1x256xf32>
    %c0_9 = arith.constant 0 : index
    %c0_10 = arith.constant 0 : index
    %c0_11 = arith.constant 0 : index
    %24 = vector.load %arg4[%c0_9, %c0_10, %c0_11] : memref<1x1x256xf32, #tpu.memory_space<vmem>>, vector<1x1x256xf32>
    %25 = vector.shape_cast %24 : vector<1x1x256xf32> to vector<1x256xf32>
    %26 = arith.mulf %23, %25 : vector<1x256xf32>
    %c0_12 = arith.constant 0 : index
    %c0_13 = arith.constant 0 : index
    %c0_14 = arith.constant 0 : index
    %27 = vector.load %arg5[%c0_12, %c0_13, %c0_14] : memref<1x1x256xf32, #tpu.memory_space<vmem>>, vector<1x1x256xf32>
    %28 = vector.shape_cast %27 : vector<1x1x256xf32> to vector<1x256xf32>
    %29 = arith.addf %28, %26 : vector<1x256xf32>
    %c0_15 = arith.constant 0 : index
    %c0_16 = arith.constant 0 : index
    %c0_17 = arith.constant 0 : index
    %30 = vector.load %arg5[%c0_15, %c0_16, %c0_17] : memref<1x1x256xf32, #tpu.memory_space<vmem>>, vector<1x1x256xf32>
    %31 = vector.shape_cast %30 : vector<1x1x256xf32> to vector<1x256xf32>
    %32 = vector.shape_cast %29 : vector<1x256xf32> to vector<1x1x256xf32>
    tpu.vector_store %arg5[%c0_15, %c0_16, %c0_17], %32 {strides = array<i32>} : memref<1x1x256xf32, #tpu.memory_space<vmem>>, vector<1x1x256xf32>,
    %c0_18 = arith.constant 0 : index
    %c0_19 = arith.constant 0 : index
    %c0_20 = arith.constant 0 : index
    %33 = vector.load %arg6[%c0_18, %c0_19, %c0_20] : memref<1x1x256xf32, #tpu.memory_space<vmem>>, vector<1x1x256xf32>
    %34 = vector.shape_cast %33 : vector<1x1x256xf32> to vector<1x256xf32>
    %35 = arith.addf %34, %25 : vector<1x256xf32>
    %c0_21 = arith.constant 0 : index
    %c0_22 = arith.constant 0 : index
    %c0_23 = arith.constant 0 : index
    %36 = vector.load %arg6[%c0_21, %c0_22, %c0_23] : memref<1x1x256xf32, #tpu.memory_space<vmem>>, vector<1x1x256xf32>
    %37 = vector.shape_cast %36 : vector<1x1x256xf32> to vector<1x256xf32>
    %38 = vector.shape_cast %35 : vector<1x256xf32> to vector<1x1x256xf32>
    tpu.vector_store %arg6[%c0_21, %c0_22, %c0_23], %38 {strides = array<i32>} : memref<1x1x256xf32, #tpu.memory_space<vmem>>, vector<1x1x256xf32>,
    return
  }
  func.func @transform_0(%arg0: i32, %arg1: i32) -> (i32, i32, i32) {
    %c0_i32 = arith.constant 0 : i32
    %c0_i32_0 = arith.constant 0 : i32
    return %arg0, %c0_i32, %arg1 : i32, i32, i32
  }
  func.func @transform_1(%arg0: i32, %arg1: i32) -> (i32, i32, i32) {
    %c0_i32 = arith.constant 0 : i32
    %c0_i32_0 = arith.constant 0 : i32
    return %arg0, %c0_i32, %arg1 : i32, i32, i32
  }
  func.func @transform_2(%arg0: i32, %arg1: i32) -> (i32, i32, i32) {
    %c0_i32 = arith.constant 0 : i32
    %c0_i32_0 = arith.constant 0 : i32
    return %arg0, %c0_i32, %arg1 : i32, i32, i32
  }
  func.func @transform_3(%arg0: i32, %arg1: i32) -> (i32, i32, i32) {
    %c0_i32 = arith.constant 0 : i32
    %c0_i32_0 = arith.constant 0 : i32
    %c0_i32_1 = arith.constant 0 : i32
    return %arg0, %c0_i32, %c0_i32_0 : i32, i32, i32
  }
  func.func @transform_4(%arg0: i32, %arg1: i32) -> (i32, i32, i32) {
    %c0_i32 = arith.constant 0 : i32
    %c0_i32_0 = arith.constant 0 : i32
    %c0_i32_1 = arith.constant 0 : i32
    return %arg0, %c0_i32, %c0_i32_0 : i32, i32, i32
  }
}

</mosaic_0001>

<llo_original>
// kernel: tpu_custom_call.1
$region0: #{tpu_custom_call.1}
  #allocation0 [shape = 'u32[]', space=smem, size = 0x4, offset = 0x4, fixed_abs, tag = 'smem constant byte address 0x4 - core index']
  #allocation1 [shape = 'u32[72,128]{1,0:T(1,128)}', space=vmem, size = 0x9000, scoped, tag = 'internal scratch']
  %s0 = inlined_call_operand.hbm [shape: f32[2,4,256], index: 0, kind: input, shape index: {}]
  %s1 = inlined_call_operand.hbm [shape: s32[2,1,256], index: 1, kind: input, shape index: {}]
  %s2 = inlined_call_operand.hbm [shape: f32[2,1,256], index: 2, kind: input, shape index: {}]
  %s3 = inlined_call_operand.hbm [shape: f32[2,1,256], index: 3, kind: output, shape index: {0}]
  %s4 = inlined_call_operand.hbm [shape: f32[2,1,256], index: 4, kind: output, shape index: {1}]
  %5 = xla_tuple %s3, %s4
  %s6 = sld [smem:[#allocation0]]
  $region69: #{tpu_custom_call.1} parent=0
    _
  %s8 = ssub.s32 1, %s6
  %s9 = scalar_select 0, %s8, %s6
  $region1: #{tpu_custom_call.1} parent=0
    #allocation2 [shape = 'u8[8192]{0}', space=vmem, size = 0x2000, scoped, tag = 'input window, operand 0']
    #allocation3 [shape = 's32[2]{0}', space=sflag, size = 0x8, scoped, tag = 'scoped memory for tpu_custom_call.1']
    #allocation4 [shape = 's32[2]{0}', space=sflag, size = 0x8, scoped, tag = 'scoped memory for tpu_custom_call.1']
    #allocation5 [shape = 'u8[2048]{0}', space=vmem, size = 0x800, scoped, tag = 'input window, operand 1']
    #allocation6 [shape = 's32[2]{0}', space=sflag, size = 0x8, scoped, tag = 'scoped memory for tpu_custom_call.1']
    #allocation7 [shape = 'u8[2048]{0}', space=vmem, size = 0x800, scoped, tag = 'input window, operand 2']
    #allocation8 [shape = 'u8[2048]{0}', space=vmem, size = 0x800, scoped, tag = 'output window, operand 0']
    #allocation9 [shape = 'u8[2048]{0}', space=vmem, size = 0x800, scoped, tag = 'output window, operand 1']
    #allocation10 [shape = 's32[2]{0}', space=sflag, size = 0x8, scoped, tag = 'scoped memory for tpu_custom_call.1']
    %10 = vsyncpa [#allocation3], 0
    %s11 = scalar_lea.sflag [#allocation3], 1
    %12 = vsyncpa %s11, 0
    %13 = vsyncpa [#allocation6], 0
    %s14 = scalar_lea.sflag [#allocation6], 1
    %15 = vsyncpa %s14, 0
    %16 = vsyncpa [#allocation4], 0
    %s17 = scalar_lea.sflag [#allocation4], 1
    %18 = vsyncpa %s17, 0
    %19 = vsyncpa [#allocation10], 0
    %s20 = scalar_lea.sflag [#allocation10], 1
    %21 = vsyncpa %s20, 0
    loop: start=0, step=1, limit=4
    $region2: #{tpu_custom_call.1} parent=1 // loop_pre_header
      _
    $region3: #{tpu_custom_call.1} parent=1 // loop_header
      %s23 = sphi 0, %s27
      %p24 = scmp.ge.s32.totalorder %s23, 4
      %s30 = sphi 0, %s42
      %s31 = sphi 0, %s38
      %s32 = sphi 0, %s30
      %s33 = sphi 0, %s31
      %s34 = sphi 0, %s32
      %s35 = sphi 0, %s33
      %s47 = sphi 0, %s49
      %s50 = sphi 0, %s47
      %s51 = sphi 0, %s50
      %s67 = sphi 0, %s51
      %s75 = sphi 0, %s77
      %s78 = sphi 0, %s75
      %s79 = sphi 0, %s78
      %s95 = sphi 0, %s79
      %s103 = sphi 0, %s105
      %s106 = sphi 0, %s103
      %s107 = sphi 0, %s106
      %s123 = sphi 0, %s107
      %s129 = sphi 0, %s131
      %s132 = sphi 0, %s129
      %s133 = sphi 0, %s132
      %s149 = sphi 0, %s133
      %s155 = sphi 0, %s157
      %s158 = sphi 0, %s155
      %s159 = sphi 0, %s158
      %s175 = sphi 0, %s159
    $region4: #{tpu_custom_call.1} parent=1 // loop_header_branch
      %26 = sbr.rel (%p24) target = $region8
    $region5: #{tpu_custom_call.1} parent=1 // loop_body
      %s28 = ssub.s32 %s23, 1
      %s29 = ssub.s32 %s23, 2
      %s36 = sadd.s32 1, %s31
      %p37 = scmp.ge.s32.totalorder %s36, 1
      %s38 = scalar_select %p37, 0, %s36
      %s39 = sadd.s32 1, %s30
      %s40 = scalar_select %p37, %s39, %s30
      %p41 = scmp.ge.s32.totalorder %s40, 2
      %s42 = scalar_select %p41, 0, %s40
      %s43 = ssub.s32 %s30, %s42
      %s44 = ssub.s32 %s31, %s38
      %s45 = sor.u32 %s43, %s44
      %p46 = scmp.eq.s32.totalorder %s45, 0
      %s48 = sadd.s32 %s47, 1
      %s49 = scalar_select %p46, %s47, %s48
      %p52 = pneg %p46
      %p53 = scmp.eq.s32.totalorder %s23, 1
      %p54 = por %p52, %p53
      %p55 = scmp.ne.s32.totalorder %s47, %s50
      %p56 = scmp.eq.s32.totalorder %s23, 0
      %p57 = por %p55, %p56
      %p58 = scmp.ne.s32.totalorder %s47, %s50
      %p59 = scmp.eq.s32.totalorder %s28, 1
      %p60 = por %p58, %p59
      %p61 = scmp.ne.s32.totalorder %s50, %s51
      %p62 = scmp.eq.s32.totalorder %s28, 0
      %p63 = por %p61, %p62
      %p64 = scmp.ne.s32.totalorder %s50, %s51
      %p65 = scmp.eq.s32.totalorder %s29, 1
      %p66 = por %p64, %p65
      %p68 = scmp.ne.s32.totalorder %s51, %s67
      %p69 = scmp.eq.s32.totalorder %s29, 0
      %p70 = por %p68, %p69
      %s71 = ssub.s32 %s30, %s42
      %s72 = ssub.s32 %s31, %s38
      %s73 = sor.u32 %s71, %s72
      %p74 = scmp.eq.s32.totalorder %s73, 0
      %s76 = sadd.s32 %s75, 1
      %s77 = scalar_select %p74, %s75, %s76
      %p80 = pneg %p74
      %p81 = scmp.eq.s32.totalorder %s23, 1
      %p82 = por %p80, %p81
      %p83 = scmp.ne.s32.totalorder %s75, %s78
      %p84 = scmp.eq.s32.totalorder %s23, 0
      %p85 = por %p83, %p84
      %p86 = scmp.ne.s32.totalorder %s75, %s78
      %p87 = scmp.eq.s32.totalorder %s28, 1
      %p88 = por %p86, %p87
      %p89 = scmp.ne.s32.totalorder %s78, %s79
      %p90 = scmp.eq.s32.totalorder %s28, 0
      %p91 = por %p89, %p90
      %p92 = scmp.ne.s32.totalorder %s78, %s79
      %p93 = scmp.eq.s32.totalorder %s29, 1
      %p94 = por %p92, %p93
      %p96 = scmp.ne.s32.totalorder %s79, %s95
      %p97 = scmp.eq.s32.totalorder %s29, 0
      %p98 = por %p96, %p97
      %s99 = ssub.s32 %s30, %s42
      %s100 = ssub.s32 %s31, %s38
      %s101 = sor.u32 %s99, %s100
      %p102 = scmp.eq.s32.totalorder %s101, 0
      %s104 = sadd.s32 %s103, 1
      %s105 = scalar_select %p102, %s103, %s104
      %p108 = pneg %p102
      %p109 = scmp.eq.s32.totalorder %s23, 1
      %p110 = por %p108, %p109
      %p111 = scmp.ne.s32.totalorder %s103, %s106
      %p112 = scmp.eq.s32.totalorder %s23, 0
      %p113 = por %p111, %p112
      %p114 = scmp.ne.s32.totalorder %s103, %s106
      %p115 = scmp.eq.s32.totalorder %s28, 1
      %p116 = por %p114, %p115
      %p117 = scmp.ne.s32.totalorder %s106, %s107
      %p118 = scmp.eq.s32.totalorder %s28, 0
      %p119 = por %p117, %p118
      %p120 = scmp.ne.s32.totalorder %s106, %s107
      %p121 = scmp.eq.s32.totalorder %s29, 1
      %p122 = por %p120, %p121
      %p124 = scmp.ne.s32.totalorder %s107, %s123
      %p125 = scmp.eq.s32.totalorder %s29, 0
      %p126 = por %p124, %p125
      %s127 = ssub.s32 %s30, %s42
      %p128 = scmp.eq.s32.totalorder %s127, 0
      %s130 = sadd.s32 %s129, 1
      %s131 = scalar_select %p128, %s129, %s130
      %p134 = pneg %p128
      %p135 = scmp.eq.s32.totalorder %s23, 1
      %p136 = por %p134, %p135
      %p137 = scmp.ne.s32.totalorder %s129, %s132
      %p138 = scmp.eq.s32.totalorder %s23, 0
      %p139 = por %p137, %p138
      %p140 = scmp.ne.s32.totalorder %s129, %s132
      %p141 = scmp.eq.s32.totalorder %s28, 1
      %p142 = por %p140, %p141
      %p143 = scmp.ne.s32.totalorder %s132, %s133
      %p144 = scmp.eq.s32.totalorder %s28, 0
      %p145 = por %p143, %p144
      %p146 = scmp.ne.s32.totalorder %s132, %s133
      %p147 = scmp.eq.s32.totalorder %s29, 1
      %p148 = por %p146, %p147
      %p150 = scmp.ne.s32.totalorder %s133, %s149
      %p151 = scmp.eq.s32.totalorder %s29, 0
      %p152 = por %p150, %p151
      %s153 = ssub.s32 %s30, %s42
      %p154 = scmp.eq.s32.totalorder %s153, 0
      %s156 = sadd.s32 %s155, 1
      %s157 = scalar_select %p154, %s155, %s156
      %p160 = pneg %p154
      %p161 = scmp.eq.s32.totalorder %s23, 1
      %p162 = por %p160, %p161
      %p163 = scmp.ne.s32.totalorder %s155, %s158
      %p164 = scmp.eq.s32.totalorder %s23, 0
      %p165 = por %p163, %p164
      %p166 = scmp.ne.s32.totalorder %s155, %s158
      %p167 = scmp.eq.s32.totalorder %s28, 1
      %p168 = por %p166, %p167
      %p169 = scmp.ne.s32.totalorder %s158, %s159
      %p170 = scmp.eq.s32.totalorder %s28, 0
      %p171 = por %p169, %p170
      %p172 = scmp.ne.s32.totalorder %s158, %s159
      %p173 = scmp.eq.s32.totalorder %s29, 1
      %p174 = por %p172, %p173
      %p176 = scmp.ne.s32.totalorder %s159, %s175
      %p177 = scmp.eq.s32.totalorder %s29, 0
      %p178 = por %p176, %p177
      %p179 = scmp.le.s32.totalorder 1, %s23
      %p180 = scmp.lt.s32.totalorder %s23, 3
      %p181 = pnand %p179, %p180
      %p182 = pneg %p181
      // Predicated region
      $region9: #{tpu_custom_call.1} parent=5 // pred_check
        _
      $region10: #{tpu_custom_call.1} parent=5 // pred_check_branch
        %184 = sbr.rel (%p181) target = $region12
      $region11: #{tpu_custom_call.1} parent=5 // pred_region
        %s185 = ssub.s32 %s23, 1
      $region12: #{tpu_custom_call.1} parent=5 // pred_fallthru
        _
      %p186 = scmp.lt.s32.totalorder %s23, 2
      // Predicated region
      $region13: #{tpu_custom_call.1} parent=5 // pred_check
        %p187 = pneg %p186
      $region14: #{tpu_custom_call.1} parent=5 // pred_check_branch
        %189 = sbr.rel (%p187) target = $region16
      $region15: #{tpu_custom_call.1} parent=5 // pred_region
        // Predicated region
        $region17: #{tpu_custom_call.1} parent=15 // pred_check
          %p190 = pneg %p57
        $region18: #{tpu_custom_call.1} parent=15 // pred_check_branch
          %192 = sbr.rel (%p190) target = $region20
        $region19: #{tpu_custom_call.1} parent=15 // pred_region
          %s193 = sand.u32 %s47, 1
          %s194 = scalar_lea.sflag [#allocation3], %s193
          %s195 = sand.u32 %s47, 1
          %s196 = smul.addr %s195, 8
          %s197 = scalar_lea.vmem [#allocation2], %s196
          %s198 = smul.u32 2, %s31
          %200 = vsyncadd %s194, 0
          %s201 = smul.addr %s30, 2
          %s202 = sadd.s32 %s198, %s201
          %s203 = smul.addr %s202, 4
          %s204 = scalar_lea.hbm %s0, %s203
          %s206 = sshll.u32 %s204, 4
          %s207 = int_to_ptr.hbm [resolvable:$true] %s206
          %s208 = sshll.u32 %s197, 4
          %s209 = int_to_ptr.vmem [resolvable:$true] %s208
          %211 = dma.hbm_to_vmem [thread:$0]  %s207, 128, %s209, %s194
        $region20: #{tpu_custom_call.1} parent=15 // pred_fallthru
          _
        // Predicated region
        $region21: #{tpu_custom_call.1} parent=15 // pred_check
          %p212 = pneg %p85
        $region22: #{tpu_custom_call.1} parent=15 // pred_check_branch
          %214 = sbr.rel (%p212) target = $region24
        $region23: #{tpu_custom_call.1} parent=15 // pred_region
          %s215 = sand.u32 %s23, 1
          %s216 = scalar_lea.sflag [#allocation6], %s215
          %s217 = sand.u32 %s75, 1
          %s218 = smul.addr %s217, 2
          %s219 = scalar_lea.vmem [#allocation5], %s218
          %s220 = smul.u32 2, %s31
          %222 = vsyncadd %s216, 0
          %s223 = smul.addr %s30, 2
          %s224 = sadd.s32 %s220, %s223
          %s225 = scalar_lea.hbm %s1, %s224
          %s227 = sshll.u32 %s225, 4
          %s228 = int_to_ptr.hbm [resolvable:$true] %s227
          %s229 = sshll.u32 %s219, 4
          %s230 = int_to_ptr.vmem [resolvable:$true] %s229
          %232 = dma.hbm_to_vmem [thread:$0]  %s228, 32, %s230, %s216
        $region24: #{tpu_custom_call.1} parent=15 // pred_fallthru
          _
        // Predicated region
        $region25: #{tpu_custom_call.1} parent=15 // pred_check
          %p233 = pneg %p113
        $region26: #{tpu_custom_call.1} parent=15 // pred_check_branch
          %235 = sbr.rel (%p233) target = $region28
        $region27: #{tpu_custom_call.1} parent=15 // pred_region
          %s236 = sand.u32 %s23, 1
          %s237 = scalar_lea.sflag [#allocation6], %s236
          %s238 = sand.u32 %s103, 1
          %s239 = smul.addr %s238, 2
          %s240 = scalar_lea.vmem [#allocation7], %s239
          %s241 = smul.u32 2, %s31
          %243 = vsyncadd %s237, 0
          %s244 = smul.addr %s30, 2
          %s245 = sadd.s32 %s241, %s244
          %s246 = scalar_lea.hbm %s2, %s245
          %s248 = sshll.u32 %s246, 4
          %s249 = int_to_ptr.hbm [resolvable:$true] %s248
          %s250 = sshll.u32 %s240, 4
          %s251 = int_to_ptr.vmem [resolvable:$true] %s250
          %253 = dma.hbm_to_vmem [thread:$0]  %s249, 32, %s251, %s237
        $region28: #{tpu_custom_call.1} parent=15 // pred_fallthru
          _
      $region16: #{tpu_custom_call.1} parent=5 // pred_fallthru
        _
      %p254 = scmp.le.s32.totalorder 1, %s23
      %p255 = scmp.lt.s32.totalorder %s23, 3
      %p256 = pnand %p254, %p255
      %p257 = pneg %p256
      // Predicated region
      $region29: #{tpu_custom_call.1} parent=5 // pred_check
        _
      $region30: #{tpu_custom_call.1} parent=5 // pred_check_branch
        %259 = sbr.rel (%p256) target = $region32
      $region31: #{tpu_custom_call.1} parent=5 // pred_region
        %s260 = ssub.s32 %s23, 1
        %s261 = sand.u32 %s50, 1
        %s262 = scalar_lea.sflag [#allocation3], %s261
        %s263 = sand.u32 %s50, 1
        %s264 = smul.addr %s263, 8
        %s265 = scalar_lea.vmem [#allocation2], %s264
        // Predicated region
        $region33: #{tpu_custom_call.1} parent=31 // pred_check
          %p266 = pneg %p63
        $region34: #{tpu_custom_call.1} parent=31 // pred_check_branch
          %268 = sbr.rel (%p266) target = $region36
        $region35: #{tpu_custom_call.1} parent=31 // pred_region
          %270 = dma.done %s262, 128
        $region36: #{tpu_custom_call.1} parent=31 // pred_fallthru
          _
        %s271 = sand.u32 %s28, 1
        %s272 = scalar_lea.sflag [#allocation6], %s271
        %s273 = sand.u32 %s78, 1
        %s274 = smul.addr %s273, 2
        %s275 = scalar_lea.vmem [#allocation5], %s274
        // Predicated region
        $region37: #{tpu_custom_call.1} parent=31 // pred_check
          %p276 = pneg %p91
        $region38: #{tpu_custom_call.1} parent=31 // pred_check_branch
          %278 = sbr.rel (%p276) target = $region40
        $region39: #{tpu_custom_call.1} parent=31 // pred_region
          %280 = dma.done %s272, 32
        $region40: #{tpu_custom_call.1} parent=31 // pred_fallthru
          _
        %s281 = sand.u32 %s28, 1
        %s282 = scalar_lea.sflag [#allocation6], %s281
        %s283 = sand.u32 %s106, 1
        %s284 = smul.addr %s283, 2
        %s285 = scalar_lea.vmem [#allocation7], %s284
        // Predicated region
        $region41: #{tpu_custom_call.1} parent=31 // pred_check
          %p286 = pneg %p119
        $region42: #{tpu_custom_call.1} parent=31 // pred_check_branch
          %288 = sbr.rel (%p286) target = $region44
        $region43: #{tpu_custom_call.1} parent=31 // pred_region
          %290 = dma.done %s282, 32
        $region44: #{tpu_custom_call.1} parent=31 // pred_fallthru
          _
        %s291 = sand.u32 %s50, 1
        %s292 = scalar_lea.sflag [#allocation3], %s291
        %s293 = sand.u32 %s50, 1
        %s294 = smul.addr %s293, 8
        %s295 = scalar_lea.vmem [#allocation2], %s294
        %p296 = pneg %p63
        %p297 = pneg %p60
        %s298 = sand.u32 %s28, 1
        %s299 = scalar_lea.sflag [#allocation6], %s298
        %s300 = sand.u32 %s78, 1
        %s301 = smul.addr %s300, 2
        %s302 = scalar_lea.vmem [#allocation5], %s301
        %p303 = pneg %p91
        %p304 = pneg %p88
        %s305 = sand.u32 %s28, 1
        %s306 = scalar_lea.sflag [#allocation6], %s305
        %s307 = sand.u32 %s106, 1
        %s308 = smul.addr %s307, 2
        %s309 = scalar_lea.vmem [#allocation7], %s308
        %p310 = pneg %p119
        %p311 = pneg %p116
        %p312 = pneg %p145
        %p313 = pneg %p142
        %s314 = sand.u32 %s132, 1
        %s315 = scalar_lea.sflag [#allocation4], %s314
        %s316 = sand.u32 %s132, 1
        %s317 = smul.addr %s316, 2
        %s318 = scalar_lea.vmem [#allocation8], %s317
        %p319 = pneg %p171
        %p320 = pneg %p168
        %s321 = sand.u32 %s158, 1
        %s322 = scalar_lea.sflag [#allocation10], %s321
        %s323 = sand.u32 %s158, 1
        %s324 = smul.addr %s323, 2
        %s325 = scalar_lea.vmem [#allocation9], %s324
        %s326 = smul.u32 2, %s33
        %s327 = smul.u32 2, %s33
        %s328 = smul.u32 2, %s33
        %p329 = scmp.eq.s32.totalorder %s33, 0
        // Predicated region
        $region45: #{tpu_custom_call.1} parent=31 // pred_check
          %p330 = pneg %p329
        $region46: #{tpu_custom_call.1} parent=31 // pred_check_branch
          %332 = sbr.rel (%p330) target = $region48
        $region47: #{tpu_custom_call.1} parent=31 // pred_region
          %v333 = vlaneseq
          %vm334 = vcmp.ge.s32.totalorder %v333, 0
          %vm335 = vcmp.lt.s32.totalorder %v333, 256
          %vm336 = vmand %vm334, %vm335
          %337 = vst.msk [vmem:[%s318] sm:$0x3] %vm336, 0.0
          %338 = vst.msk [vmem:[%s325] sm:$0x3] %vm336, 0.0
        $region48: #{tpu_custom_call.1} parent=31 // pred_fallthru
          _
        %v339 = vld [vmem:[%s265] sm:$0xff]
        %v340 = vld [vmem:[%s275] sm:$0x3]
        %342 = vst [vmem:[#allocation1] ss:$2 sm:$0xff] %v339
        %v343 = vld.sshfl [vmem:[#allocation1] sm:$0xff pattern:$0x75316420]
        %v344 = vld.sshfl [vmem:[#allocation1 + $0x8] sm:$0xff pattern:$0x75316420]
        %vm347 = vcmask 1043456
        %v348 = vsel %vm347, %v343, -inf
        %v349 = vrot.slane %v348, 4
        %v350 = vmax.f32 %v348, %v349
        %v351 = vrot.slane %v350, 2
        %v352 = vmax.f32 %v350, %v351
        %v353 = vrot.slane %v352, 1
        %v354 = vmax.f32 %v352, %v353
        %v355 = vsel %vm347, %v344, -inf
        %v356 = vrot.slane %v355, 4
        %v357 = vmax.f32 %v355, %v356
        %v358 = vrot.slane %v357, 2
        %v359 = vmax.f32 %v357, %v358
        %v360 = vrot.slane %v359, 1
        %v361 = vmax.f32 %v359, %v360
        %v362 = vlaneseq
        %v363 = vshrl.u32 %v362, 7
        %v364 = vperm.slane %v340, 0
        %v365 = vperm.slane %v340, 1
        %vm366 = vcmp.eq.s32.totalorder %v363, %v364
        %vm367 = vcmp.eq.s32.totalorder %v363, %v365
        %368 = vst [vmem:[#allocation1] ss:$2 sm:$0xff] %v339
        %v369 = vld.sshfl [vmem:[#allocation1] sm:$0xff pattern:$0x75316420]
        %v370 = vld.sshfl [vmem:[#allocation1 + $0x8] sm:$0xff pattern:$0x75316420]
        %v373 = vsel %vm366, %v369, 0.0
        %v374 = vsel %vm367, %v370, 0.0
        %v375 = vsel %vm347, %v373, 0.0
        %v376 = vrot.slane %v375, 4
        %v377 = vadd.f32 %v375, %v376
        %v378 = vrot.slane %v377, 2
        %v379 = vadd.f32 %v377, %v378
        %v380 = vrot.slane %v379, 1
        %v381 = vadd.f32 %v379, %v380
        %v382 = vsel %vm347, %v374, 0.0
        %v383 = vrot.slane %v382, 4
        %v384 = vadd.f32 %v382, %v383
        %v385 = vrot.slane %v384, 2
        %v386 = vadd.f32 %v384, %v385
        %v387 = vrot.slane %v386, 1
        %v388 = vadd.f32 %v386, %v387
        %v391 = vrot.slane %v361, 4
        %v392 = vsel %vm347, %v354, %v391
        %v394 = vsub.f32 %v339, %v392
        %v395 = vmul.f32 %v394, 1.442695
        %v396 = vpow.pop %v395
        %398 = vst [vmem:[#allocation1] ss:$2 sm:$0xff] %v396
        %v399 = vld.sshfl [vmem:[#allocation1] sm:$0xff pattern:$0x75316420]
        %v400 = vld.sshfl [vmem:[#allocation1 + $0x8] sm:$0xff pattern:$0x75316420]
        %v403 = vsel %vm347, %v399, 0.0
        %v404 = vrot.slane %v403, 4
        %v405 = vadd.f32 %v403, %v404
        %v406 = vrot.slane %v405, 2
        %v407 = vadd.f32 %v405, %v406
        %v408 = vrot.slane %v407, 1
        %v409 = vadd.f32 %v407, %v408
        %v410 = vsel %vm347, %v400, 0.0
        %v411 = vrot.slane %v410, 4
        %v412 = vadd.f32 %v410, %v411
        %v413 = vrot.slane %v412, 2
        %v414 = vadd.f32 %v412, %v413
        %v415 = vrot.slane %v414, 1
        %v416 = vadd.f32 %v414, %v415
        %v417 = vlog2.pop %v409
        %v418 = vmul.f32 %v417, 0.6931472
        %v419 = vlog2.pop %v416
        %v420 = vmul.f32 %v419, 0.6931472
        %v421 = vsub.f32 %v354, %v381
        %v422 = vsub.f32 %v361, %v388
        %v423 = vadd.f32 %v421, %v418
        %v424 = vadd.f32 %v422, %v420
        %v425 = vld [vmem:[%s285] sm:$0x3]
        %v427 = vperm.slane %v425, 0
        %v428 = vperm.slane %v425, 1
        %v431 = vmul.f32 %v423, %v427
        %v432 = vmul.f32 %v424, %v428
        %v433 = vld [vmem:[%s318] sm:$0x3]
        %v436 = vrot.slane %v432, 7
        %vm437 = vcmask 1040384
        %v438 = vsel %vm437, %v431, %v436
        %v440 = vadd.f32 %v433, %v438
        %v441 = vlaneseq
        %vm442 = vcmp.ge.s32.totalorder %v441, 0
        %vm443 = vcmp.lt.s32.totalorder %v441, 256
        %vm444 = vmand %vm442, %vm443
        %445 = vst.msk [vmem:[%s318] sm:$0x3] %vm444, %v440
        %v446 = vld [vmem:[%s325] sm:$0x3]
        %v447 = vadd.f32 %v446, %v425
        %448 = vst.msk [vmem:[%s325] sm:$0x3] %vm444, %v447
        %s449 = sand.u32 %s132, 1
        %s450 = scalar_lea.sflag [#allocation4], %s449
        %s451 = sand.u32 %s132, 1
        %s452 = smul.addr %s451, 2
        %s453 = scalar_lea.vmem [#allocation8], %s452
        %s454 = sand.u32 %s158, 1
        %s455 = scalar_lea.sflag [#allocation10], %s454
        %s456 = sand.u32 %s158, 1
        %s457 = smul.addr %s456, 2
        %s458 = scalar_lea.vmem [#allocation9], %s457
        // Predicated region
        $region49: #{tpu_custom_call.1} parent=31 // pred_check
          %p459 = pneg %p142
        $region50: #{tpu_custom_call.1} parent=31 // pred_check_branch
          %461 = sbr.rel (%p459) target = $region52
        $region51: #{tpu_custom_call.1} parent=31 // pred_region
          %463 = vsyncadd %s450, 0
          %s464 = smul.addr %s32, 2
          %s465 = scalar_lea.hbm %s3, %s464
          %s467 = sshll.u32 %s453, 4
          %s468 = int_to_ptr.vmem [resolvable:$true] %s467
          %s469 = sshll.u32 %s465, 4
          %s470 = int_to_ptr.hbm [resolvable:$true] %s469
          %472 = dma.vmem_to_hbm [thread:$0]  %s468, 32, %s470, %s450
        $region52: #{tpu_custom_call.1} parent=31 // pred_fallthru
          _
        // Predicated region
        $region53: #{tpu_custom_call.1} parent=31 // pred_check
          %p473 = pneg %p168
        $region54: #{tpu_custom_call.1} parent=31 // pred_check_branch
          %475 = sbr.rel (%p473) target = $region56
        $region55: #{tpu_custom_call.1} parent=31 // pred_region
          %477 = vsyncadd %s455, 0
          %s478 = smul.addr %s32, 2
          %s479 = scalar_lea.hbm %s4, %s478
          %s481 = sshll.u32 %s458, 4
          %s482 = int_to_ptr.vmem [resolvable:$true] %s481
          %s483 = sshll.u32 %s479, 4
          %s484 = int_to_ptr.hbm [resolvable:$true] %s483
          %486 = dma.vmem_to_hbm [thread:$0]  %s482, 32, %s484, %s455
        $region56: #{tpu_custom_call.1} parent=31 // pred_fallthru
          _
      $region32: #{tpu_custom_call.1} parent=5 // pred_fallthru
        _
      %p487 = scmp.le.s32.totalorder 2, %s23
      // Predicated region
      $region57: #{tpu_custom_call.1} parent=5 // pred_check
        %p488 = pneg %p487
      $region58: #{tpu_custom_call.1} parent=5 // pred_check_branch
        %490 = sbr.rel (%p488) target = $region60
      $region59: #{tpu_custom_call.1} parent=5 // pred_region
        %s491 = ssub.s32 %s23, 2
        // Predicated region
        $region61: #{tpu_custom_call.1} parent=59 // pred_check
          %p492 = pneg %p148
        $region62: #{tpu_custom_call.1} parent=59 // pred_check_branch
          %494 = sbr.rel (%p492) target = $region64
        $region63: #{tpu_custom_call.1} parent=59 // pred_region
          %s495 = sand.u32 %s133, 1
          %s496 = scalar_lea.sflag [#allocation4], %s495
          %s497 = sand.u32 %s133, 1
          %s498 = smul.addr %s497, 2
          %s499 = scalar_lea.vmem [#allocation8], %s498
          %501 = dma.done %s496, 32
        $region64: #{tpu_custom_call.1} parent=59 // pred_fallthru
          _
        // Predicated region
        $region65: #{tpu_custom_call.1} parent=59 // pred_check
          %p502 = pneg %p174
        $region66: #{tpu_custom_call.1} parent=59 // pred_check_branch
          %504 = sbr.rel (%p502) target = $region68
        $region67: #{tpu_custom_call.1} parent=59 // pred_region
          %s505 = sand.u32 %s159, 1
          %s506 = scalar_lea.sflag [#allocation10], %s505
          %s507 = sand.u32 %s159, 1
          %s508 = smul.addr %s507, 2
          %s509 = scalar_lea.vmem [#allocation9], %s508
          %511 = dma.done %s506, 32
        $region68: #{tpu_custom_call.1} parent=59 // pred_fallthru
          _
      $region60: #{tpu_custom_call.1} parent=5 // pred_fallthru
        _
    $region6: #{tpu_custom_call.1} parent=1 // loop_footer
      %s27 = sadd.s32 1, %s23
    $region7: #{tpu_custom_call.1} parent=1 // loop_footer_branch
      %22 = sbr.rel target = $region3
    $region8: #{tpu_custom_call.1} parent=1 // loop_exit
      _
    %512 = vsyncpa [#allocation3], 1
    %s513 = scalar_lea.sflag [#allocation3], 1
    %514 = vsyncpa %s513, 1
    %515 = vsyncpa [#allocation6], 1
    %s516 = scalar_lea.sflag [#allocation6], 1
    %517 = vsyncpa %s516, 1
    %518 = vsyncpa [#allocation4], 1
    %s519 = scalar_lea.sflag [#allocation4], 1
    %520 = vsyncpa %s519, 1
    %521 = vsyncpa [#allocation10], 1
    %s522 = scalar_lea.sflag [#allocation10], 1
    %523 = vsyncpa %s522, 1

</llo_original>
